<compile_context>
chip_gen: v7x
topology: tpu7x:2x2x1
jax: 0.10.0
libtpu: 0.0.40
codegen_flags: <defaults>
</compile_context>

<pallas_src>
import functools
import math

import jax
import jax.numpy as jnp
from jax import lax
from jax.experimental import pallas as pl
from jax.experimental.pallas import tpu as pltpu

_LN_EPS = 1e-5


@functools.lru_cache(maxsize=1)
def _vmem_limit_bytes():
    """~75% of physical VMEM: ~48 MiB on v7x (64 MiB), ~96 MiB on v5e/v6e."""
    cap = 64 * 1024 * 1024
    try:
        cap = int(getattr(pltpu.get_tpu_info(), "vmem_capacity_bytes", cap))
    except Exception:
        pass
    return max(32 * 1024 * 1024, min(3 * cap // 4, 112 * 1024 * 1024))


def _gelu_tanh(x):
    c = math.sqrt(2.0 / math.pi)
    return 0.5 * x * (1.0 + jnp.tanh(c * (x + 0.044715 * x * x * x)))


def _tile(dim, target, align=128):
    """Return (tile, padded_dim). tile divides padded_dim.

    dim <= target  -> single full-dim block (legal regardless of alignment).
    dim  > target  -> prefer an `align`-aligned divisor <= target; otherwise
                      pad dim up to a multiple of the aligned target (never
                      fall back to one giant block).
    """
    if dim <= target:
        return dim, dim
    t = (target // align) * align
    while t >= align:
        if dim % t == 0:
            return t, dim
        t -= align
    tile = (target // align) * align
    return tile, dim + (-dim % tile)


def _seq_tile(dim, target):
    """Largest aligned divisor of dim <= target (128 preferred, then 8)."""
    if dim <= target:
        return dim
    for align in (128, 8):
        t = (target // align) * align
        while t >= align:
            if dim % t == 0:
                return t
            t -= align
    return dim  # no aligned divisor: keep full (correct, just less tiled)


# --------------------------- tiled linear kernel ----------------------------

def _linear_kernel(x_ref, w_ref, b_ref, o_ref, acc_ref, *, activation):
    @pl.when(pl.program_id(2) == 0)
    def _():
        acc_ref[...] = jnp.zeros_like(acc_ref)

    # bf16 MXU operands, fp32 accumulation.
    acc_ref[...] += jnp.dot(x_ref[...].astype(jnp.bfloat16),
                            w_ref[...].astype(jnp.bfloat16),
                            preferred_element_type=jnp.float32)

    @pl.when(pl.program_id(2) == pl.num_programs(2) - 1)
    def _():
        out = acc_ref[...] + b_ref[...].astype(jnp.float32)
        if activation == "gelu":
            out = _gelu_tanh(out)
        o_ref[...] = out.astype(o_ref.dtype)


def fused_linear(x, w, b, activation=None, out_dtype=None,
                 tm_target=512, tn_target=512, tk_target=1024):
    """y = act(x @ w + b) via a tiled, K-accumulating, pipelined Pallas matmul."""
    M, K = x.shape
    K2, N = w.shape
    assert K == K2
    out_dtype = out_dtype or x.dtype
    tm, Mp = _tile(M, tm_target)
    tn, Np = _tile(N, tn_target)
    tk, Kp = _tile(K, tk_target)
    if (Mp, Kp) != (M, K):
        x = jnp.pad(x, ((0, Mp - M), (0, Kp - K)))
    if (Kp, Np) != (K, N):
        w = jnp.pad(w, ((0, Kp - K), (0, Np - N)))
    b2 = b.reshape(1, N)
    if Np != N:
        b2 = jnp.pad(b2, ((0, 0), (0, Np - N)))

    grid = (Mp // tm, Np // tn, Kp // tk)
    kernel = functools.partial(_linear_kernel, activation=activation)
    out = pl.pallas_call(
        kernel,
        out_shape=jax.ShapeDtypeStruct((Mp, Np), out_dtype),
        grid=grid,
        in_specs=[
            pl.BlockSpec((tm, tk), lambda i, j, k: (i, k)),
            pl.BlockSpec((tk, tn), lambda i, j, k: (k, j)),
            pl.BlockSpec((1, tn), lambda i, j, k: (0, j)),
        ],
        out_specs=pl.BlockSpec((tm, tn), lambda i, j, k: (i, j)),
        scratch_shapes=[pltpu.VMEM((tm, tn), jnp.float32)],
        compiler_params=pltpu.CompilerParams(
            dimension_semantics=("parallel", "parallel", "arbitrary"),
            vmem_limit_bytes=_vmem_limit_bytes()),
        cost_estimate=pl.CostEstimate(
            flops=2 * M * N * K,
            transcendentals=(M * N if activation == "gelu" else 0),
            bytes_accessed=(x.dtype.itemsize * M * K + w.dtype.itemsize * K * N
                            + jnp.dtype(out_dtype).itemsize * M * N)),
    )(x, w, b2)
    if (Mp, Np) != (M, N):
        out = out[:M, :N]
    return out


# --------------- matmul + residual + LayerNorm fused epilogue ---------------

def _linear_res_ln_kernel(x_ref, w_ref, b_ref, r_ref, g_ref, beta_ref,
                          o_ref, acc_ref):
    @pl.when(pl.program_id(1) == 0)
    def _():
        acc_ref[...] = jnp.zeros_like(acc_ref)

    acc_ref[...] += jnp.dot(x_ref[...].astype(jnp.bfloat16),
                            w_ref[...].astype(jnp.bfloat16),
                            preferred_element_type=jnp.float32)

    @pl.when(pl.program_id(1) == pl.num_programs(1) - 1)
    def _():
        y = (acc_ref[...] + b_ref[...].astype(jnp.float32)
             + r_ref[...].astype(jnp.float32))
        mean = jnp.mean(y, axis=-1, keepdims=True)
        var = jnp.mean(jnp.square(y - mean), axis=-1, keepdims=True)
        y = (y - mean) * lax.rsqrt(var + _LN_EPS)
        y = y * g_ref[...].astype(jnp.float32) + beta_ref[...].astype(jnp.float32)
        o_ref[...] = y.astype(o_ref.dtype)


def fused_linear_res_ln(x, w, b, residual, gamma, beta, out_dtype=None,
                        tm_target=256, tk_target=1024):
    """LayerNorm(residual + x @ w + b); full output row (N) resident at finalize."""
    M, K = x.shape
    K2, N = w.shape
    assert K == K2 and residual.shape == (M, N)
    out_dtype = out_dtype or residual.dtype
    tm, Mp = _tile(M, tm_target)
    tk, Kp = _tile(K, tk_target)
    if (Mp, Kp) != (M, K):
        x = jnp.pad(x, ((0, Mp - M), (0, Kp - K)))
    if Kp != K:
        w = jnp.pad(w, ((0, Kp - K), (0, 0)))
    if Mp != M:
        residual = jnp.pad(residual, ((0, Mp - M), (0, 0)))

    grid = (Mp // tm, Kp // tk)
    out = pl.pallas_call(
        _linear_res_ln_kernel,
        out_shape=jax.ShapeDtypeStruct((Mp, N), out_dtype),
        grid=grid,
        in_specs=[
            pl.BlockSpec((tm, tk), lambda i, k: (i, k)),
            pl.BlockSpec((tk, N), lambda i, k: (k, 0)),
            pl.BlockSpec((1, N), lambda i, k: (0, 0)),
            pl.BlockSpec((tm, N), lambda i, k: (i, 0)),
            pl.BlockSpec((1, N), lambda i, k: (0, 0)),
            pl.BlockSpec((1, N), lambda i, k: (0, 0)),
        ],
        out_specs=pl.BlockSpec((tm, N), lambda i, k: (i, 0)),
        scratch_shapes=[pltpu.VMEM((tm, N), jnp.float32)],
        compiler_params=pltpu.CompilerParams(
            dimension_semantics=("parallel", "arbitrary"),
            vmem_limit_bytes=_vmem_limit_bytes()),
        cost_estimate=pl.CostEstimate(
            flops=2 * M * N * K + 10 * M * N,
            transcendentals=M,
            bytes_accessed=(x.dtype.itemsize * M * K + w.dtype.itemsize * K * N
                            + residual.dtype.itemsize * M * N
                            + jnp.dtype(out_dtype).itemsize * M * N)),
    )(x, w, b.reshape(1, N), residual, gamma.reshape(1, N), beta.reshape(1, N))
    if Mp != M:
        out = out[:M]
    return out


# --------------------- flash-style multi-head attention ---------------------

def _flash_kernel(q_ref, k_ref, v_ref, o_ref, m_sc, l_sc, acc_sc, *, scale):
    kv = pl.program_id(3)

    @pl.when(kv == 0)
    def _():
        m_sc[...] = jnp.full_like(m_sc, -jnp.inf)
        l_sc[...] = jnp.zeros_like(l_sc)
        acc_sc[...] = jnp.zeros_like(acc_sc)

    q = q_ref[0, 0].astype(jnp.bfloat16)                       # [tq, dk]
    k = k_ref[0, 0].astype(jnp.bfloat16)                       # [tkv, dk]
    # scores: contract d_k on both operands -> no transpose of k needed.
    s = lax.dot_general(q, k, (((1,), (1,)), ((), ())),
                        preferred_element_type=jnp.float32) * scale   # [tq, tkv]

    m_prev = m_sc[...]
    m_new = jnp.maximum(m_prev, jnp.max(s, axis=-1, keepdims=True))
    alpha = jnp.exp(m_prev - m_new)
    p = jnp.exp(s - m_new)
    l_sc[...] = alpha * l_sc[...] + jnp.sum(p, axis=-1, keepdims=True)
    acc_sc[...] = alpha * acc_sc[...] + jnp.dot(
        p.astype(jnp.bfloat16), v_ref[0, 0].astype(jnp.bfloat16),
        preferred_element_type=jnp.float32)
    m_sc[...] = m_new

    @pl.when(kv == pl.num_programs(3) - 1)
    def _():
        inv_l = pl.reciprocal(l_sc[...], approx=True)
        o_ref[0, 0] = (acc_sc[...] * inv_l).astype(o_ref.dtype)


def flash_attention(q, k, v, *, tq_target=256, tkv_target=512):
    """softmax(q kᵀ / sqrt(dk)) v per (batch, head); q/k/v: [B, H, S, dk]."""
    B, H, S, dk = q.shape
    tq = _seq_tile(S, tq_target)
    tkv = _seq_tile(S, tkv_target)
    grid = (B, H, S // tq, S // tkv)
    kernel = functools.partial(_flash_kernel, scale=1.0 / math.sqrt(dk))
    return pl.pallas_call(
        kernel,
        out_shape=jax.ShapeDtypeStruct((B, H, S, dk), jnp.bfloat16),
        grid=grid,
        in_specs=[
            pl.BlockSpec((1, 1, tq, dk), lambda b, h, i, j: (b, h, i, 0)),
            pl.BlockSpec((1, 1, tkv, dk), lambda b, h, i, j: (b, h, j, 0)),
            pl.BlockSpec((1, 1, tkv, dk), lambda b, h, i, j: (b, h, j, 0)),
        ],
        out_specs=pl.BlockSpec((1, 1, tq, dk), lambda b, h, i, j: (b, h, i, 0)),
        scratch_shapes=[pltpu.VMEM((tq, 1), jnp.float32),
                        pltpu.VMEM((tq, 1), jnp.float32),
                        pltpu.VMEM((tq, dk), jnp.float32)],
        compiler_params=pltpu.CompilerParams(
            dimension_semantics=("parallel", "parallel", "parallel", "arbitrary"),
            vmem_limit_bytes=_vmem_limit_bytes()),
        cost_estimate=pl.CostEstimate(
            flops=4 * B * H * S * S * dk,
            transcendentals=B * H * S * S,
            bytes_accessed=4 * q.dtype.itemsize * B * H * S * dk),
    )(q, k, v)


# ------------------------------ module wrapper -------------------------------

class EncoderLayerPallas:
    def __init__(self, d_model, num_heads, d_ff, key):
        assert d_model % num_heads == 0
        self.d_model = d_model
        self.num_heads = num_heads
        self.d_k = d_model // num_heads
        self.d_ff = d_ff

        ks = jax.random.split(key, 8)

        def u(k, shape, fan_in, dtype=jnp.float32):
            bound = 1.0 / math.sqrt(fan_in)
            w = jax.random.uniform(k, shape, jnp.float32, -bound, bound)
            return w.astype(dtype)

        # Weights stored bf16 (MXU-native); biases & LN params fp32 (epilogue).
        self.Wqkv = u(ks[0], (d_model, 3 * d_model), d_model, jnp.bfloat16)
        self.bqkv = u(ks[1], (3 * d_model,), d_model)
        self.Wo = u(ks[2], (d_model, d_model), d_model, jnp.bfloat16)
        self.bo = u(ks[3], (d_model,), d_model)
        self.W1 = u(ks[4], (d_model, d_ff), d_model, jnp.bfloat16)
        self.b1 = u(ks[5], (d_ff,), d_model)
        self.W2 = u(ks[6], (d_ff, d_model), d_ff, jnp.bfloat16)
        self.b2 = u(ks[7], (d_model,), d_ff)
        # LayerNorms (PyTorch default init).
        self.g1 = jnp.ones((d_model,), jnp.float32)
        self.be1 = jnp.zeros((d_model,), jnp.float32)
        self.g2 = jnp.ones((d_model,), jnp.float32)
        self.be2 = jnp.zeros((d_model,), jnp.float32)

    def __call__(self, x):
        B, S, D = x.shape
        H, dk = self.num_heads, self.d_k
        x2d = x.reshape(B * S, D)

        # Fused Q|K|V projection; qkv written to HBM in bf16 (half traffic).
        qkv = fused_linear(x2d, self.Wqkv, self.bqkv, out_dtype=jnp.bfloat16)

        # Head-major [B, H, S, dk] layout -> contiguous, lane-aligned per-head
        # tiles for the flash kernel.
        qkv4 = qkv.reshape(B, S, 3, H, dk).transpose(2, 0, 3, 1, 4)
        attn = flash_attention(qkv4[0], qkv4[1], qkv4[2])        # [B,H,S,dk] bf16
        attn2d = attn.transpose(0, 2, 1, 3).reshape(B * S, D)

        # Output projection + residual + norm1, fused into one matmul.
        x1 = fused_linear_res_ln(attn2d, self.Wo, self.bo, x2d,
                                 self.g1, self.be1, out_dtype=jnp.float32)

        # FFN: GELU fused into the first matmul, hidden kept bf16 in HBM,
        # second matmul fuses residual + norm2 (no separate LayerNorm kernel).
        h = fused_linear(x1, self.W1, self.b1, activation="gelu",
                         out_dtype=jnp.bfloat16)
        out = fused_linear_res_ln(h, self.W2, self.b2, x1, self.g2, self.be2,
                                  out_dtype=x.dtype)
        return out.reshape(B, S, D)


# --------------------------------- reference ---------------------------------

def reference(layer, x):
    B, S, D = x.shape
    H, dk = layer.num_heads, layer.d_k

    def layernorm(z, g, b):
        mean = jnp.mean(z, axis=-1, keepdims=True)
        var = jnp.mean(jnp.square(z - mean), axis=-1, keepdims=True)
        return (z - mean) / jnp.sqrt(var + _LN_EPS) * g + b

    Wqkv = layer.Wqkv.astype(jnp.float32)
    Wo = layer.Wo.astype(jnp.float32)
    W1 = layer.W1.astype(jnp.float32)
    W2 = layer.W2.astype(jnp.float32)

    x2d = x.reshape(-1, D)
    qkv = x2d @ Wqkv + layer.bqkv
    q, k, v = qkv[:, :D], qkv[:, D:2 * D], qkv[:, 2 * D:]

    def split(t):
        return t.reshape(B, S, H, dk).transpose(0, 2, 1, 3)

    q, k, v = split(q), split(k), split(v)
    s = jnp.einsum("bhqd,bhkd->bhqk", q, k) / math.sqrt(dk)
    p = jax.nn.softmax(s, axis=-1)
    o = jnp.einsum("bhqk,bhkd->bhqd", p, v).transpose(0, 2, 1, 3).reshape(-1, D)
    attn = o @ Wo + layer.bo
    x1 = layernorm(x2d + attn, layer.g1, layer.be1)
    hdn = _gelu_tanh(x1 @ W1 + layer.b1)
    ff = hdn @ W2 + layer.b2
    x2 = layernorm(x1 + ff, layer.g2, layer.be2)
    return x2.reshape(B, S, D)


if __name__ == "__main__":
    B, S, d_model, num_heads, d_ff = 2, 8, 32, 4, 64

    root = jax.random.PRNGKey(0)
    kx, kp = jax.random.split(root)
    x = jax.random.normal(kx, (B, S, d_model), jnp.float32)

    layer = EncoderLayerPallas(d_model, num_heads, d_ff, kp)

    out = jax.block_until_ready(layer(x))

    ref = reference(layer, x)
    assert out.shape == (B, S, d_model)
    # bf16 MXU operands (fp32 accumulation) + approx EUP reciprocal in the
    # softmax denominator -> looser tolerance vs. the fp32 reference.
    assert jnp.allclose(out, ref, atol=3e-2, rtol=3e-2), "mismatch vs reference"

    print("KERNEL_OK")
</pallas_src>

<mosaic_0001>
module attributes {stable_mosaic.version = 11 : i64} {
  func.func @_linear_kernel(%arg0: i32, %arg1: i32, %arg2: i32, %arg3: memref<16x32xf32, #tpu.memory_space<vmem>>, %arg4: memref<32x96xbf16, #tpu.memory_space<vmem>>, %arg5: memref<1x96xf32, #tpu.memory_space<vmem>>, %arg6: memref<16x96xbf16, #tpu.memory_space<vmem>>, %arg7: memref<16x96xf32, #tpu.memory_space<vmem>>) attributes {dimension_semantics = [#tpu.dimension_semantics<parallel>, #tpu.dimension_semantics<parallel>, #tpu.dimension_semantics<arbitrary>], iteration_bounds = array<i64: 1, 1, 1>, scalar_prefetch = 0 : i64, scratch_operands = 1 : i64, tpu.core_type = #tpu.core_type<tc>, window_params = [{transform_indices = @transform_0, window_bounds = array<i64: 16, 32>}, {transform_indices = @transform_1, window_bounds = array<i64: 32, 96>}, {transform_indices = @transform_2, window_bounds = array<i64: 1, 96>}, {transform_indices = @transform_3, window_bounds = array<i64: 16, 96>}]} {
    %c0_i32 = arith.constant 0 : i32
    %0 = arith.cmpi eq, %arg2, %c0_i32 : i32
    %1 = arith.extui %0 : i1 to i32
    %c0_i32_0 = arith.constant 0 : i32
    %2 = arith.cmpi ne, %1, %c0_i32_0 : i32
    scf.if %2 {
      %cst_10 = arith.constant 0.000000e+00 : f32
      %13 = vector.broadcast %cst_10 : f32 to vector<16x96xf32>
      %c0_11 = arith.constant 0 : index
      %c0_12 = arith.constant 0 : index
      %14 = vector.load %arg7[%c0_11, %c0_12] : memref<16x96xf32, #tpu.memory_space<vmem>>, vector<16x96xf32>
      tpu.vector_store %arg7[%c0_11, %c0_12], %13 {strides = array<i32>} : memref<16x96xf32, #tpu.memory_space<vmem>>, vector<16x96xf32>,
    } else {
    }
    %c0 = arith.constant 0 : index
    %c0_1 = arith.constant 0 : index
    %3 = vector.load %arg7[%c0, %c0_1] : memref<16x96xf32, #tpu.memory_space<vmem>>, vector<16x96xf32>
    %c0_2 = arith.constant 0 : index
    %c0_3 = arith.constant 0 : index
    %4 = vector.load %arg3[%c0_2, %c0_3] : memref<16x32xf32, #tpu.memory_space<vmem>>, vector<16x32xf32>
    %5 = arith.truncf %4 : vector<16x32xf32> to vector<16x32xbf16>
    %c0_4 = arith.constant 0 : index
    %c0_5 = arith.constant 0 : index
    %6 = vector.load %arg4[%c0_4, %c0_5] : memref<32x96xbf16, #tpu.memory_space<vmem>>, vector<32x96xbf16>
    %cst = arith.constant dense<0.000000e+00> : vector<16x96xf32>
    %7 = tpu.matmul %5, %6, %cst {dimension_numbers = #tpu.dot_dimension_numbers<[1], [0], [0], [1], [0, 0, 1, 1], [], []>} : vector<16x32xbf16>, vector<32x96xbf16>, vector<16x96xf32> -> vector<16x96xf32>
    %8 = arith.addf %3, %7 : vector<16x96xf32>
    %c0_6 = arith.constant 0 : index
    %c0_7 = arith.constant 0 : index
    %9 = vector.load %arg7[%c0_6, %c0_7] : memref<16x96xf32, #tpu.memory_space<vmem>>, vector<16x96xf32>
    tpu.vector_store %arg7[%c0_6, %c0_7], %8 {strides = array<i32>} : memref<16x96xf32, #tpu.memory_space<vmem>>, vector<16x96xf32>,
    %c0_i32_8 = arith.constant 0 : i32
    %10 = arith.cmpi eq, %arg2, %c0_i32_8 : i32
    %11 = arith.extui %10 : i1 to i32
    %c0_i32_9 = arith.constant 0 : i32
    %12 = arith.cmpi ne, %11, %c0_i32_9 : i32
    scf.if %12 {
      %c0_10 = arith.constant 0 : index
      %c0_11 = arith.constant 0 : index
      %13 = vector.load %arg7[%c0_10, %c0_11] : memref<16x96xf32, #tpu.memory_space<vmem>>, vector<16x96xf32>
      %c0_12 = arith.constant 0 : index
      %c0_13 = arith.constant 0 : index
      %14 = vector.load %arg5[%c0_12, %c0_13] : memref<1x96xf32, #tpu.memory_space<vmem>>, vector<1x96xf32>
      %15 = vector.broadcast %14 : vector<1x96xf32> to vector<16x96xf32>
      %16 = arith.addf %13, %15 : vector<16x96xf32>
      %17 = arith.truncf %16 : vector<16x96xf32> to vector<16x96xbf16>
      %c0_14 = arith.constant 0 : index
      %c0_15 = arith.constant 0 : index
      %18 = vector.load %arg6[%c0_14, %c0_15] : memref<16x96xbf16, #tpu.memory_space<vmem>>, vector<16x96xbf16>
      tpu.vector_store %arg6[%c0_14, %c0_15], %17 {strides = array<i32>} : memref<16x96xbf16, #tpu.memory_space<vmem>>, vector<16x96xbf16>,
    } else {
    }
    return
  }
  func.func @transform_0(%arg0: i32, %arg1: i32, %arg2: i32) -> (i32, i32) {
    %c0_i32 = arith.constant 0 : i32
    return %arg0, %arg2 : i32, i32
  }
  func.func @transform_1(%arg0: i32, %arg1: i32, %arg2: i32) -> (i32, i32) {
    %c0_i32 = arith.constant 0 : i32
    return %arg2, %arg1 : i32, i32
  }
  func.func @transform_2(%arg0: i32, %arg1: i32, %arg2: i32) -> (i32, i32) {
    %c0_i32 = arith.constant 0 : i32
    %c0_i32_0 = arith.constant 0 : i32
    return %c0_i32, %arg1 : i32, i32
  }
  func.func @transform_3(%arg0: i32, %arg1: i32, %arg2: i32) -> (i32, i32) {
    %c0_i32 = arith.constant 0 : i32
    return %arg0, %arg1 : i32, i32
  }
}

</mosaic_0001>

<llo_original>
// kernel: tpu_custom_call.1
$region0: #{tpu_custom_call.1}
  #allocation0 [shape = 'u32[]', space=smem, size = 0x4, offset = 0x4, fixed_abs, tag = 'smem constant byte address 0x4 - core index']
  #allocation1 [shape = 'u32[144,128]{1,0:T(1,128)}', space=vmem, size = 0x12000, scoped, tag = 'internal scratch']
  #allocation2 [shape = 'f32[16,96]{1,0:T(8,128)}', space=vmem, size = 0x2000, scoped, tag = 'scratch operand']
  %s0 = inlined_call_operand.hbm [shape: f32[16,32], index: 0, kind: input, shape index: {}]
  %s1 = inlined_call_operand.hbm [shape: bf16[32,96], index: 1, kind: input, shape index: {}]
  %s2 = inlined_call_operand.vmem [shape: f32[1,96], index: 2, kind: input, shape index: {}]
  %s3 = inlined_call_operand.hbm [shape: bf16[16,96], index: 3, kind: output, shape index: {}]
  %s4 = sld [smem:[#allocation0]]
  $region38: #{tpu_custom_call.1} parent=0
    _
  %s6 = ssub.s32 1, %s4
  %s7 = scalar_select 0, %s6, %s4
  $region1: #{tpu_custom_call.1} parent=0
    #allocation3 [shape = 'u8[8192]{0}', space=vmem, size = 0x2000, scoped, tag = 'input window, operand 0, single buffered']
    #allocation4 [shape = 's32[1]{0}', space=sflag, size = 0x4, scoped, tag = 'scoped memory for tpu_custom_call.1']
    #allocation5 [shape = 's32[1]{0}', space=sflag, size = 0x4, scoped, tag = 'scoped memory for tpu_custom_call.1']
    #allocation6 [shape = 'u8[8192]{0}', space=vmem, size = 0x2000, scoped, tag = 'input window, operand 1, single buffered']
    #allocation7 [shape = 's32[1]{0}', space=sflag, size = 0x4, scoped, tag = 'scoped memory for tpu_custom_call.1']
    #allocation8 [shape = 'u8[4096]{0}', space=vmem, size = 0x1000, scoped, tag = 'output window, operand 0, single buffered']
    %8 = vsyncpa [#allocation4], 0
    %9 = vsyncpa [#allocation7], 0
    %10 = vsyncpa [#allocation5], 0
    // Predicated region
    $region2: #{tpu_custom_call.1} parent=1 // pred_check
      _
    $region3: #{tpu_custom_call.1} parent=1 // pred_check_branch
      %12 = sbr.rel (0) target = $region5
    $region4: #{tpu_custom_call.1} parent=1 // pred_region
      %s14 = ssub.s32 256, 256
      %15 = vsyncadd [#allocation4], %s14
      %s16 = sshll.u32 [#allocation3], 4
      %s17 = int_to_ptr.vmem [resolvable:$true] %s16
      %22 = dma.hbm_to_vmem [thread:$0]  %s0, 256, %s17, [#allocation4], 128, 128, 8
    $region5: #{tpu_custom_call.1} parent=1 // pred_fallthru
      _
    // Predicated region
    $region6: #{tpu_custom_call.1} parent=1 // pred_check
      _
    $region7: #{tpu_custom_call.1} parent=1 // pred_check_branch
      %24 = sbr.rel (0) target = $region9
    $region8: #{tpu_custom_call.1} parent=1 // pred_region
      %s26 = ssub.s32 256, 256
      %27 = vsyncadd [#allocation7], %s26
      %s28 = sshll.u32 [#allocation6], 4
      %s29 = int_to_ptr.vmem [resolvable:$true] %s28
      %34 = dma.hbm_to_vmem [thread:$0]  %s1, 256, %s29, [#allocation7], 64, 64, 4
    $region9: #{tpu_custom_call.1} parent=1 // pred_fallthru
      _
    // Predicated region
    $region10: #{tpu_custom_call.1} parent=1 // pred_check
      _
    $region11: #{tpu_custom_call.1} parent=1 // pred_check_branch
      %36 = sbr.rel (0) target = $region13
    $region12: #{tpu_custom_call.1} parent=1 // pred_region
      _
    $region13: #{tpu_custom_call.1} parent=1 // pred_fallthru
      _
    // Predicated region
    $region14: #{tpu_custom_call.1} parent=1 // pred_check
      _
    $region15: #{tpu_custom_call.1} parent=1 // pred_check_branch
      %38 = sbr.rel (0) target = $region17
    $region16: #{tpu_custom_call.1} parent=1 // pred_region
      %39 = dma.done [#allocation4], 256
    $region17: #{tpu_custom_call.1} parent=1 // pred_fallthru
      _
    // Predicated region
    $region18: #{tpu_custom_call.1} parent=1 // pred_check
      _
    $region19: #{tpu_custom_call.1} parent=1 // pred_check_branch
      %41 = sbr.rel (0) target = $region21
    $region20: #{tpu_custom_call.1} parent=1 // pred_region
      %42 = dma.done [#allocation7], 256
    $region21: #{tpu_custom_call.1} parent=1 // pred_fallthru
      _
    %p44 = scmp.eq.s32.totalorder 0, 0
    // Predicated region
    $region22: #{tpu_custom_call.1} parent=1 // pred_check
      %p45 = pneg %p44
    $region23: #{tpu_custom_call.1} parent=1 // pred_check_branch
      %47 = sbr.rel (%p45) target = $region25
    $region24: #{tpu_custom_call.1} parent=1 // pred_region
      %vm48 = vcmask 785408
      %49 = vst.msk [vmem:[#allocation2] sm:$0xff] %vm48, 0.0
      %50 = vst.msk [vmem:[#allocation2 + $0x8] sm:$0xff] %vm48, 0.0
    $region25: #{tpu_custom_call.1} parent=1 // pred_fallthru
      _
    %v51 = vld [vmem:[#allocation2] sm:$0xff]
    %v52 = vld [vmem:[#allocation2 + $0x8] sm:$0xff]
    %v53 = vld [vmem:[#allocation3] sm:$0xff]
    %v54 = vld [vmem:[#allocation3 + $0x8] sm:$0xff]
    %v55 = vpack.c.bf16 %v54, %v53
    %v56 = vld [vmem:[#allocation6] sm:$0xf]
    %v57 = vld [vmem:[#allocation6 + $0x4] sm:$0xf]
    %v58 = vld [vmem:[#allocation6 + $0x8] sm:$0xf]
    %v59 = vld [vmem:[#allocation6 + $0xc] sm:$0xf]
    %v64 = vunpack.c.l.b16 %v56
    %v65 = vunpack.c.l.b16 %v57
    %v66 = vunpack.c.l.b16 %v58
    %v67 = vunpack.c.l.b16 %v59
    %v68 = vpack.c.b16 %v65, %v64
    %v69 = vpack.c.b16 %v67, %v66
    %vm72 = vcmask 261120
    %v74 = vsel %vm72, %v55, 0
    %76 = vmatprep.subr.bf16.mxu0 0
    %77 = vmatpush1.bf16.msra.mxu0 %v68
    %78 = vmatprep.subr.bf16.mxu0 0
    %79 = vmatpush1.bf16.msra.mxu0 %v69
    %80 = vmatprep.subr.bf16.mxu0 0
    %81 = vmatpush1.bf16.msra.mxu0 0
    %82 = vmatprep.subr.bf16.mxu0 0
    %83 = vmatpush1.bf16.msra.mxu0 0
    %84 = vmatprep.subr.bf16.mxu0 0
    %85 = vmatpush1.bf16.msra.mxu0 0
    %86 = vmatprep.subr.bf16.mxu0 0
    %87 = vmatpush1.bf16.msra.mxu0 0
    %88 = vmatprep.subr.bf16.mxu0 0
    %89 = vmatpush1.bf16.msra.mxu0 0
    %90 = vmatprep.subr.bf16.mxu0 0
    %91 = vmatpush1.bf16.msra.mxu0 0
    %92 = vmatprep.subr.bf16.mxu0 0
    %93 = vmatpush1.bf16.msra.mxu0 0
    %94 = vmatprep.subr.bf16.mxu0 0
    %95 = vmatpush1.bf16.msra.mxu0 0
    %96 = vmatprep.subr.bf16.mxu0 0
    %97 = vmatpush1.bf16.msra.mxu0 0
    %98 = vmatprep.subr.bf16.mxu0 0
    %99 = vmatpush1.bf16.msra.mxu0 0
    %100 = vmatprep.subr.bf16.mxu0 0
    %101 = vmatpush1.bf16.msra.mxu0 0
    %102 = vmatprep.subr.bf16.mxu0 0
    %103 = vmatpush1.bf16.msra.mxu0 0
    %104 = vmatprep.subr.bf16.mxu0 0
    %105 = vmatpush1.bf16.msra.mxu0 0
    %106 = vmatprep.subr.bf16.mxu0 0
    %107 = vmatpush1.bf16.msra.mxu0 0
    %108 = vmatprep.mubr.bf16.mxu0 0
    %109 = vmatmul.mubr.bf16.gmra.mrb[0].mxu0 %v74
    %v110 = vpop.f32.mrb[0].mxu0
    %v111 = vadd.f32 0.0, %v110
    %v112 = vpop.f32.mrb[0].mxu0
    %v113 = vpop.f32.mrb[0].mxu0
    %v114 = vadd.f32 0.0, %v113
    %v115 = vpop.f32.mrb[0].mxu0
    %116 = vdwg.mxu0
    %v117 = vadd.f32 %v51, %v111
    %v118 = vadd.f32 %v52, %v114
    %vm119 = vcmask 785408
    %120 = vst.msk [vmem:[#allocation2] sm:$0xff] %vm119, %v117
    %121 = vst.msk [vmem:[#allocation2 + $0x8] sm:$0xff] %vm119, %v118
    // Predicated region
    $region26: #{tpu_custom_call.1} parent=1 // pred_check
      %p122 = pneg %p44
    $region27: #{tpu_custom_call.1} parent=1 // pred_check_branch
      %124 = sbr.rel (%p122) target = $region29
    $region28: #{tpu_custom_call.1} parent=1 // pred_region
      %v125 = vld [vmem:[#allocation2] sm:$0xff]
      %v126 = vld [vmem:[#allocation2 + $0x8] sm:$0xff]
      %v127 = vld [vmem:[%s2] sm:$0x1]
      %v129 = vlaneseq
      %v130 = vshrl.u32 %v129, 7
      %v131 = vsub.s32 0, %v130
      %v132 = vrot.slane %v127, %v131
      %v134 = vadd.f32 %v125, %v132
      %v135 = vadd.f32 %v126, %v132
      %v136 = vpack.c.bf16 %v135, %v134
      %v138 = vunpack.c.l.b16 %v136
      %v139 = vunpack.c.h.b16 %v136
      %v140 = vpack.c.b16 %v138, %v138
      %v141 = vpack.c.b16 %v139, %v139
      %vm144 = vcmask 781312
      %145 = vst.msk [vmem:[#allocation8] sm:$0xf] %vm144, %v140
      %146 = vst.msk [vmem:[#allocation8 + $0x4] sm:$0xf] %vm144, %v141
    $region29: #{tpu_custom_call.1} parent=1 // pred_fallthru
      _
    // Predicated region
    $region30: #{tpu_custom_call.1} parent=1 // pred_check
      _
    $region31: #{tpu_custom_call.1} parent=1 // pred_check_branch
      %148 = sbr.rel (0) target = $region33
    $region32: #{tpu_custom_call.1} parent=1 // pred_region
      %s150 = ssub.s32 128, 128
      %151 = vsyncadd [#allocation5], %s150
      %s152 = sshll.u32 [#allocation8], 4
      %s153 = int_to_ptr.vmem [resolvable:$true] %s152
      %158 = dma.vmem_to_hbm [thread:$0]  %s153, 128, %s3, [#allocation5], 64, 64, 4
    $region33: #{tpu_custom_call.1} parent=1 // pred_fallthru
      _
    // Predicated region
    $region34: #{tpu_custom_call.1} parent=1 // pred_check
      _
    $region35: #{tpu_custom_call.1} parent=1 // pred_check_branch
      %160 = sbr.rel (0) target = $region37
    $region36: #{tpu_custom_call.1} parent=1 // pred_region
      %161 = dma.done [#allocation5], 128
    $region37: #{tpu_custom_call.1} parent=1 // pred_fallthru
      _
    %162 = vsyncpa [#allocation4], 1
    %163 = vsyncpa [#allocation7], 1
    %164 = vsyncpa [#allocation5], 1

</llo_original>
